<compile_context>
chip_gen: v7x
topology: tpu7x:2x2x1
jax: 0.10.0
libtpu: 0.0.40
codegen_flags: <defaults>
</compile_context>

<pallas_src>
import jax
import jax.numpy as jnp
from jax.experimental import pallas as pl
from jax.experimental.pallas import tpu as pltpu

NEG_SLOPE = 0.01   # torch.nn.functional.leaky_relu default negative_slope
_LANE = 128


def _round_up(x, m):
    return (x + m - 1) // m * m


def _lanes(d):
    return _round_up(max(int(d), 1), _LANE)


# --------------- lane-dense kernel: mailbox folded to (N, K*D) ---------------
def _gat_flat_kernel(a1_ref, a2_ref, ma1_ref, ma2_ref, ft_ref, out_ref, base_ref):
    f32 = jnp.float32
    D = a1_ref.shape[1]
    KD = ma1_ref.shape[1]
    K = KD // D

    a1 = a1_ref[...].astype(f32)             # (TN, D)
    a2 = a2_ref[...].astype(f32)             # (TN, D)
    ma1 = ma1_ref[...].astype(f32)           # (TN, K*D) lane-dense
    ma2 = ma2_ref[...].astype(f32)           # (TN, K*D)

    # s[n,k] = sum_d(a1 + a2)[n] + sum_d(ma1 + ma2)[n,k]
    s_node = jnp.sum(a1 + a2, axis=-1, keepdims=True)      # (TN, 1)
    y = ma1 + ma2                                           # (TN, K*D)

    # base[n, k*D + d] = a2[n, d] + s[n, k] : built per segment into a VMEM
    # scratch (small masked slice stores) so the heavy elementwise work below
    # stays on fully lane-dense (TN, K*D) values.
    for k in range(K):
        sl = slice(k * D, (k + 1) * D)
        s_k = jnp.sum(y[:, sl], axis=-1, keepdims=True)     # (TN, 1)
        base_ref[:, sl] = a2 + (s_node + s_k)               # (TN, D)

    # logits = leaky_relu(s + b), with b = a2 + mail_a1, all flat.
    z = base_ref[...] + ma1                                  # (TN, K*D)
    z = jnp.maximum(z, NEG_SLOPE * z)                        # leaky_relu

    # Softmax over the neighbor axis: position p = k*D + d only interacts with
    # positions of equal d (stride D), so the k-reductions are circular
    # roll-trees on the XLU (result is already broadcast over k, and the
    # construction is independent of the roll direction convention).
    m = z
    shift = D
    while shift < KD:
        m = jnp.maximum(m, pltpu.roll(m, shift, axis=1))
        shift *= 2
    p = jnp.exp(z - m)                                       # (TN, K*D)

    ft = ft_ref[...].astype(f32)                             # (TN, K*D)
    num = p * ft
    den = p
    shift = D
    while shift < KD:
        num = num + pltpu.roll(num, shift, axis=1)
        den = den + pltpu.roll(den, shift, axis=1)
        shift *= 2

    # TODO(synk): attn_drop (nn.Dropout) is identity here since attn_drop=0.
    # After the sum trees every segment holds the full k-sum; take segment 0.
    acc = num[:, 0:D]                                        # (TN, F)
    denom = den[:, 0:D]                                      # (TN, F)
    out_ref[...] = (acc / denom).astype(out_ref.dtype)       # exact normalize


# --------------------------- generic 3-D fallback ----------------------------
def _gat_3d_kernel(a1_ref, a2_ref, ma1_ref, ma2_ref, ft_ref, out_ref):
    f32 = jnp.float32
    a1 = a1_ref[...].astype(f32)             # (TN, D)
    a2 = a2_ref[...].astype(f32)             # (TN, D)
    ma1 = ma1_ref[...].astype(f32)           # (TN, K, D)
    ma2 = ma2_ref[...].astype(f32)           # (TN, K, D)
    ft = ft_ref[...].astype(f32)             # (TN, K, F)

    b = a2[:, None, :] + ma1                                 # (TN, K, D)
    s_node = jnp.sum(a1 + a2, axis=-1, keepdims=True)        # (TN, 1)
    s_mail = jnp.sum(ma1, axis=-1) + jnp.sum(ma2, axis=-1)   # (TN, K)
    s = s_node + s_mail                                      # (TN, K)

    z = s[:, :, None] + b                                    # (TN, K, D)
    z = jnp.maximum(z, NEG_SLOPE * z)                        # leaky_relu

    m = jnp.max(z, axis=1, keepdims=True)                    # (TN, 1, D)
    p = jnp.exp(z - m)                                       # (TN, K, D)
    denom = jnp.sum(p, axis=1)                               # (TN, D)
    acc = jnp.sum(p * ft, axis=1)                            # (TN, F)
    out_ref[...] = (acc / denom).astype(out_ref.dtype)


def gat_symmetry_reduce(a1, a2, mail_a1, mail_a2, ft, *, tile_n=None):
    N, D = a1.shape
    _, K, F = ft.shape
    assert a2.shape == (N, D)
    assert mail_a1.shape == (N, K, D)
    assert mail_a2.shape == (N, K, D)
    assert D == F or D == 1, "e * ft needs broadcast-compatible D vs F"
    # TODO(synk): the D == 1, F > 1 broadcast path uses the generic fallback
    # and carries heavily masked lanes; correct but slow.

    KD = K * D
    out_dtype = ft.dtype
    use_flat = (D == F) and ((K & (K - 1)) == 0) and (KD % _LANE == 0)

    # Sublane-pack alignment of the node tile (bf16 packs 2 rows per sublane).
    min_item = min(int(x.dtype.itemsize) for x in (a1, a2, mail_a1, mail_a2, ft))
    row_align = 8 * max(1, 4 // min_item)

    # Real VMEM bytes per node row: lane-padded pipeline blocks (x2 for double
    # buffering) plus the in-kernel f32 temporaries / scratch.
    if use_flat:
        blocks = (a1.dtype.itemsize * _lanes(D) + a2.dtype.itemsize * _lanes(D)
                  + (mail_a1.dtype.itemsize + mail_a2.dtype.itemsize
                     + ft.dtype.itemsize) * KD
                  + out_dtype.itemsize * _lanes(F))
        temps = 4 * (10 * KD + KD)          # ~10 live f32 flat values + base scratch
    else:
        kp = _round_up(K, 8)
        blocks = ((a1.dtype.itemsize + a2.dtype.itemsize) * _lanes(D)
                  + (mail_a1.dtype.itemsize + mail_a2.dtype.itemsize) * kp * _lanes(D)
                  + ft.dtype.itemsize * kp * _lanes(F)
                  + out_dtype.itemsize * _lanes(F))
        temps = 4 * 5 * kp * _lanes(max(D, F))
    per_row = 2 * blocks + temps
    # TODO(synk): for very large K an online-softmax loop over K-chunks would
    # bound the temporaries at O(TN*F) instead of O(TN*K*D).

    # Generation-aware VMEM budget (v5e/v6e: 128 MiB physical, v7x: 64 MiB).
    try:
        vmem_cap = int(pltpu.get_tpu_info().vmem_capacity_bytes)
    except Exception:
        vmem_cap = 128 << 20
    vmem_limit = min((vmem_cap * 9) // 16, 64 << 20)   # 64MiB -> 36MiB, 128MiB -> 64MiB
    tile_budget = (vmem_limit * 3) // 4                # headroom for model error

    if tile_n is None:
        tile_n = max(row_align, min(4096, tile_budget // per_row))
        # Keep >= ~8 grid steps so the BlockSpec pipeline has work to overlap
        # and the "parallel" node axis can shard across v7x's two TensorCores.
        tile_n = min(tile_n, _round_up(pl.cdiv(N, 8), row_align))
    tile_n = min(tile_n, _round_up(N, row_align))
    tile_n = max(row_align, (tile_n // row_align) * row_align)

    # Pad N up to a tile multiple; padded rows are sliced off at the end.
    n_pad = _round_up(N, tile_n)
    if n_pad != N:
        pad = n_pad - N
        a1 = jnp.pad(a1, ((0, pad), (0, 0)))
        a2 = jnp.pad(a2, ((0, pad), (0, 0)))
        mail_a1 = jnp.pad(mail_a1, ((0, pad), (0, 0), (0, 0)))
        mail_a2 = jnp.pad(mail_a2, ((0, pad), (0, 0), (0, 0)))
        ft = jnp.pad(ft, ((0, pad), (0, 0), (0, 0)))

    grid = (n_pad // tile_n,)
    cparams = pltpu.CompilerParams(
        dimension_semantics=("parallel",),
        vmem_limit_bytes=int(vmem_limit),
    )

    if use_flat:
        ma1_f = mail_a1.reshape(n_pad, KD)   # contiguous reshape -> free
        ma2_f = mail_a2.reshape(n_pad, KD)
        ft_f = ft.reshape(n_pad, KD)
        out = pl.pallas_call(
            _gat_flat_kernel,
            out_shape=jax.ShapeDtypeStruct((n_pad, F), out_dtype),
            grid_spec=pltpu.PrefetchScalarGridSpec(
                num_scalar_prefetch=0,
                grid=grid,
                in_specs=[
                    pl.BlockSpec((tile_n, D), lambda i: (i, 0)),
                    pl.BlockSpec((tile_n, D), lambda i: (i, 0)),
                    pl.BlockSpec((tile_n, KD), lambda i: (i, 0)),
                    pl.BlockSpec((tile_n, KD), lambda i: (i, 0)),
                    pl.BlockSpec((tile_n, KD), lambda i: (i, 0)),
                ],
                out_specs=pl.BlockSpec((tile_n, F), lambda i: (i, 0)),
                scratch_shapes=[pltpu.VMEM((tile_n, KD), jnp.float32)],
            ),
            compiler_params=cparams,
        )(a1, a2, ma1_f, ma2_f, ft_f)
    else:
        out = pl.pallas_call(
            _gat_3d_kernel,
            out_shape=jax.ShapeDtypeStruct((n_pad, F), out_dtype),
            grid_spec=pltpu.PrefetchScalarGridSpec(
                num_scalar_prefetch=0,
                grid=grid,
                in_specs=[
                    pl.BlockSpec((tile_n, D), lambda i: (i, 0)),
                    pl.BlockSpec((tile_n, D), lambda i: (i, 0)),
                    pl.BlockSpec((tile_n, K, D), lambda i: (i, 0, 0)),
                    pl.BlockSpec((tile_n, K, D), lambda i: (i, 0, 0)),
                    pl.BlockSpec((tile_n, K, F), lambda i: (i, 0, 0)),
                ],
                out_specs=pl.BlockSpec((tile_n, F), lambda i: (i, 0)),
            ),
            compiler_params=cparams,
        )(a1, a2, mail_a1, mail_a2, ft)
    return out[:N]


def gat_symmetry_reduce_ref(a1, a2, mail_a1, mail_a2, ft):
    """Pure-JAX reference mirroring the PyTorch GatSymmetryReduce.forward."""
    a = a1[:, None, :] + mail_a2
    b = a2[:, None, :] + mail_a1
    a = a + b
    s = jnp.sum(a, axis=-1, keepdims=True)
    z = s + b
    z = jnp.where(z > 0, z, NEG_SLOPE * z)
    e = jax.nn.softmax(z, axis=1)
    return jnp.sum(e * ft, axis=1)


if __name__ == "__main__":
    key = jax.random.PRNGKey(0)

    # Lane-dense path: D == F, K power of two, K*D multiple of 128.
    # N deliberately not a multiple of 8 to exercise the padding / tail path.
    N, K, D, F = 20, 8, 32, 32
    k1, k2, k3, k4, k5, k6 = jax.random.split(key, 6)
    a1 = jax.random.normal(k1, (N, D), dtype=jnp.float32)
    a2 = jax.random.normal(k2, (N, D), dtype=jnp.float32)
    mail_a1 = jax.random.normal(k3, (N, K, D), dtype=jnp.float32)
    mail_a2 = jax.random.normal(k4, (N, K, D), dtype=jnp.float32)
    ft = jax.random.normal(k5, (N, K, F), dtype=jnp.float32)

    out = jax.block_until_ready(gat_symmetry_reduce(a1, a2, mail_a1, mail_a2, ft))
    ref = gat_symmetry_reduce_ref(a1, a2, mail_a1, mail_a2, ft)
    assert out.shape == (N, F)
    assert jnp.allclose(out, ref, atol=1e-4, rtol=1e-4), float(
        jnp.max(jnp.abs(out - ref)))

    # Generic fallback path: K not a power of two -> 3-D kernel.
    N2, K2, D2, F2 = 9, 5, 16, 16
    j1, j2, j3, j4, j5 = jax.random.split(k6, 5)
    b1 = jax.random.normal(j1, (N2, D2), dtype=jnp.float32)
    b2 = jax.random.normal(j2, (N2, D2), dtype=jnp.float32)
    mb1 = jax.random.normal(j3, (N2, K2, D2), dtype=jnp.float32)
    mb2 = jax.random.normal(j4, (N2, K2, D2), dtype=jnp.float32)
    ft2 = jax.random.normal(j5, (N2, K2, F2), dtype=jnp.float32)

    out2 = jax.block_until_ready(gat_symmetry_reduce(b1, b2, mb1, mb2, ft2))
    ref2 = gat_symmetry_reduce_ref(b1, b2, mb1, mb2, ft2)
    assert out2.shape == (N2, F2)
    assert jnp.allclose(out2, ref2, atol=1e-4, rtol=1e-4), float(
        jnp.max(jnp.abs(out2 - ref2)))

    print("KERNEL_OK")
</pallas_src>

<mosaic_0001>
module attributes {stable_mosaic.version = 11 : i64} {
  func.func @_gat_flat_kernel(%arg0: i32, %arg1: memref<8x32xf32, #tpu.memory_space<vmem>>, %arg2: memref<8x32xf32, #tpu.memory_space<vmem>>, %arg3: memref<8x256xf32, #tpu.memory_space<vmem>>, %arg4: memref<8x256xf32, #tpu.memory_space<vmem>>, %arg5: memref<8x256xf32, #tpu.memory_space<vmem>>, %arg6: memref<8x32xf32, #tpu.memory_space<vmem>>, %arg7: memref<8x256xf32, #tpu.memory_space<vmem>>) attributes {dimension_semantics = [#tpu.dimension_semantics<parallel>], iteration_bounds = array<i64: 3>, scalar_prefetch = 0 : i64, scratch_operands = 1 : i64, tpu.core_type = #tpu.core_type<tc>, window_params = [{transform_indices = @transform_0, window_bounds = array<i64: 8, 32>}, {transform_indices = @transform_1, window_bounds = array<i64: 8, 32>}, {transform_indices = @transform_2, window_bounds = array<i64: 8, 256>}, {transform_indices = @transform_3, window_bounds = array<i64: 8, 256>}, {transform_indices = @transform_4, window_bounds = array<i64: 8, 256>}, {transform_indices = @transform_5, window_bounds = array<i64: 8, 32>}]} {
    %c0 = arith.constant 0 : index
    %c0_0 = arith.constant 0 : index
    %0 = vector.load %arg1[%c0, %c0_0] : memref<8x32xf32, #tpu.memory_space<vmem>>, vector<8x32xf32>
    %c0_1 = arith.constant 0 : index
    %c0_2 = arith.constant 0 : index
    %1 = vector.load %arg2[%c0_1, %c0_2] : memref<8x32xf32, #tpu.memory_space<vmem>>, vector<8x32xf32>
    %c0_3 = arith.constant 0 : index
    %c0_4 = arith.constant 0 : index
    %2 = vector.load %arg3[%c0_3, %c0_4] : memref<8x256xf32, #tpu.memory_space<vmem>>, vector<8x256xf32>
    %c0_5 = arith.constant 0 : index
    %c0_6 = arith.constant 0 : index
    %3 = vector.load %arg4[%c0_5, %c0_6] : memref<8x256xf32, #tpu.memory_space<vmem>>, vector<8x256xf32>
    %4 = arith.addf %0, %1 : vector<8x32xf32>
    %cst = arith.constant dense<0.000000e+00> : vector<8xf32>
    %5 = vector.multi_reduction <add>, %4, %cst [1] : vector<8x32xf32> to vector<8xf32>
    %6 = vector.shape_cast %5 : vector<8xf32> to vector<8x1xf32>
    %7 = arith.addf %2, %3 : vector<8x256xf32>
    %8 = vector.extract_strided_slice %7 {offsets = [0, 0], sizes = [8, 32], strides = [1, 1]} : vector<8x256xf32> to vector<8x32xf32>
    %cst_7 = arith.constant dense<0.000000e+00> : vector<8xf32>
    %9 = vector.multi_reduction <add>, %8, %cst_7 [1] : vector<8x32xf32> to vector<8xf32>
    %10 = vector.shape_cast %9 : vector<8xf32> to vector<8x1xf32>
    %11 = arith.addf %6, %10 : vector<8x1xf32>
    %12 = vector.broadcast %11 : vector<8x1xf32> to vector<8x32xf32>
    %13 = arith.addf %1, %12 : vector<8x32xf32>
    %c0_8 = arith.constant 0 : index
    %c0_9 = arith.constant 0 : index
    %14 = vector.load %arg7[%c0_8, %c0_9] : memref<8x256xf32, #tpu.memory_space<vmem>>, vector<8x32xf32>
    tpu.vector_store %arg7[%c0_8, %c0_9], %13 {strides = array<i32>} : memref<8x256xf32, #tpu.memory_space<vmem>>, vector<8x32xf32>,
    %15 = vector.extract_strided_slice %7 {offsets = [0, 32], sizes = [8, 32], strides = [1, 1]} : vector<8x256xf32> to vector<8x32xf32>
    %cst_10 = arith.constant dense<0.000000e+00> : vector<8xf32>
    %16 = vector.multi_reduction <add>, %15, %cst_10 [1] : vector<8x32xf32> to vector<8xf32>
    %17 = vector.shape_cast %16 : vector<8xf32> to vector<8x1xf32>
    %18 = arith.addf %6, %17 : vector<8x1xf32>
    %19 = vector.broadcast %18 : vector<8x1xf32> to vector<8x32xf32>
    %20 = arith.addf %1, %19 : vector<8x32xf32>
    %c0_11 = arith.constant 0 : index
    %c32 = arith.constant 32 : index
    %21 = vector.load %arg7[%c0_11, %c32] : memref<8x256xf32, #tpu.memory_space<vmem>>, vector<8x32xf32>
    tpu.vector_store %arg7[%c0_11, %c32], %20 {strides = array<i32>} : memref<8x256xf32, #tpu.memory_space<vmem>>, vector<8x32xf32>,
    %22 = vector.extract_strided_slice %7 {offsets = [0, 64], sizes = [8, 32], strides = [1, 1]} : vector<8x256xf32> to vector<8x32xf32>
    %cst_12 = arith.constant dense<0.000000e+00> : vector<8xf32>
    %23 = vector.multi_reduction <add>, %22, %cst_12 [1] : vector<8x32xf32> to vector<8xf32>
    %24 = vector.shape_cast %23 : vector<8xf32> to vector<8x1xf32>
    %25 = arith.addf %6, %24 : vector<8x1xf32>
    %26 = vector.broadcast %25 : vector<8x1xf32> to vector<8x32xf32>
    %27 = arith.addf %1, %26 : vector<8x32xf32>
    %c0_13 = arith.constant 0 : index
    %c64 = arith.constant 64 : index
    %28 = vector.load %arg7[%c0_13, %c64] : memref<8x256xf32, #tpu.memory_space<vmem>>, vector<8x32xf32>
    tpu.vector_store %arg7[%c0_13, %c64], %27 {strides = array<i32>} : memref<8x256xf32, #tpu.memory_space<vmem>>, vector<8x32xf32>,
    %29 = vector.extract_strided_slice %7 {offsets = [0, 96], sizes = [8, 32], strides = [1, 1]} : vector<8x256xf32> to vector<8x32xf32>
    %cst_14 = arith.constant dense<0.000000e+00> : vector<8xf32>
    %30 = vector.multi_reduction <add>, %29, %cst_14 [1] : vector<8x32xf32> to vector<8xf32>
    %31 = vector.shape_cast %30 : vector<8xf32> to vector<8x1xf32>
    %32 = arith.addf %6, %31 : vector<8x1xf32>
    %33 = vector.broadcast %32 : vector<8x1xf32> to vector<8x32xf32>
    %34 = arith.addf %1, %33 : vector<8x32xf32>
    %c0_15 = arith.constant 0 : index
    %c96 = arith.constant 96 : index
    %35 = vector.load %arg7[%c0_15, %c96] : memref<8x256xf32, #tpu.memory_space<vmem>>, vector<8x32xf32>
    tpu.vector_store %arg7[%c0_15, %c96], %34 {strides = array<i32>} : memref<8x256xf32, #tpu.memory_space<vmem>>, vector<8x32xf32>,
    %36 = vector.extract_strided_slice %7 {offsets = [0, 128], sizes = [8, 32], strides = [1, 1]} : vector<8x256xf32> to vector<8x32xf32>
    %cst_16 = arith.constant dense<0.000000e+00> : vector<8xf32>
    %37 = vector.multi_reduction <add>, %36, %cst_16 [1] : vector<8x32xf32> to vector<8xf32>
    %38 = vector.shape_cast %37 : vector<8xf32> to vector<8x1xf32>
    %39 = arith.addf %6, %38 : vector<8x1xf32>
    %40 = vector.broadcast %39 : vector<8x1xf32> to vector<8x32xf32>
    %41 = arith.addf %1, %40 : vector<8x32xf32>
    %c0_17 = arith.constant 0 : index
    %c128 = arith.constant 128 : index
    %42 = vector.load %arg7[%c0_17, %c128] : memref<8x256xf32, #tpu.memory_space<vmem>>, vector<8x32xf32>
    tpu.vector_store %arg7[%c0_17, %c128], %41 {strides = array<i32>} : memref<8x256xf32, #tpu.memory_space<vmem>>, vector<8x32xf32>,
    %43 = vector.extract_strided_slice %7 {offsets = [0, 160], sizes = [8, 32], strides = [1, 1]} : vector<8x256xf32> to vector<8x32xf32>
    %cst_18 = arith.constant dense<0.000000e+00> : vector<8xf32>
    %44 = vector.multi_reduction <add>, %43, %cst_18 [1] : vector<8x32xf32> to vector<8xf32>
    %45 = vector.shape_cast %44 : vector<8xf32> to vector<8x1xf32>
    %46 = arith.addf %6, %45 : vector<8x1xf32>
    %47 = vector.broadcast %46 : vector<8x1xf32> to vector<8x32xf32>
    %48 = arith.addf %1, %47 : vector<8x32xf32>
    %c0_19 = arith.constant 0 : index
    %c160 = arith.constant 160 : index
    %49 = vector.load %arg7[%c0_19, %c160] : memref<8x256xf32, #tpu.memory_space<vmem>>, vector<8x32xf32>
    tpu.vector_store %arg7[%c0_19, %c160], %48 {strides = array<i32>} : memref<8x256xf32, #tpu.memory_space<vmem>>, vector<8x32xf32>,
    %50 = vector.extract_strided_slice %7 {offsets = [0, 192], sizes = [8, 32], strides = [1, 1]} : vector<8x256xf32> to vector<8x32xf32>
    %cst_20 = arith.constant dense<0.000000e+00> : vector<8xf32>
    %51 = vector.multi_reduction <add>, %50, %cst_20 [1] : vector<8x32xf32> to vector<8xf32>
    %52 = vector.shape_cast %51 : vector<8xf32> to vector<8x1xf32>
    %53 = arith.addf %6, %52 : vector<8x1xf32>
    %54 = vector.broadcast %53 : vector<8x1xf32> to vector<8x32xf32>
    %55 = arith.addf %1, %54 : vector<8x32xf32>
    %c0_21 = arith.constant 0 : index
    %c192 = arith.constant 192 : index
    %56 = vector.load %arg7[%c0_21, %c192] : memref<8x256xf32, #tpu.memory_space<vmem>>, vector<8x32xf32>
    tpu.vector_store %arg7[%c0_21, %c192], %55 {strides = array<i32>} : memref<8x256xf32, #tpu.memory_space<vmem>>, vector<8x32xf32>,
    %57 = vector.extract_strided_slice %7 {offsets = [0, 224], sizes = [8, 32], strides = [1, 1]} : vector<8x256xf32> to vector<8x32xf32>
    %cst_22 = arith.constant dense<0.000000e+00> : vector<8xf32>
    %58 = vector.multi_reduction <add>, %57, %cst_22 [1] : vector<8x32xf32> to vector<8xf32>
    %59 = vector.shape_cast %58 : vector<8xf32> to vector<8x1xf32>
    %60 = arith.addf %6, %59 : vector<8x1xf32>
    %61 = vector.broadcast %60 : vector<8x1xf32> to vector<8x32xf32>
    %62 = arith.addf %1, %61 : vector<8x32xf32>
    %c0_23 = arith.constant 0 : index
    %c224 = arith.constant 224 : index
    %63 = vector.load %arg7[%c0_23, %c224] : memref<8x256xf32, #tpu.memory_space<vmem>>, vector<8x32xf32>
    tpu.vector_store %arg7[%c0_23, %c224], %62 {strides = array<i32>} : memref<8x256xf32, #tpu.memory_space<vmem>>, vector<8x32xf32>,
    %c0_24 = arith.constant 0 : index
    %c0_25 = arith.constant 0 : index
    %64 = vector.load %arg7[%c0_24, %c0_25] : memref<8x256xf32, #tpu.memory_space<vmem>>, vector<8x256xf32>
    %65 = arith.addf %64, %2 : vector<8x256xf32>
    %cst_26 = arith.constant 0.00999999977 : f32
    %66 = vector.broadcast %cst_26 : f32 to vector<8x256xf32>
    %67 = arith.mulf %66, %65 : vector<8x256xf32>
    %68 = arith.maximumf %65, %67 : vector<8x256xf32>
    %c32_i32 = arith.constant 32 : i32
    %69 = tpu.dynamic_rotate %68 by %c32_i32 dim 1 : vector<8x256xf32>, i32 -> vector<8x256xf32>
    %70 = arith.maximumf %68, %69 : vector<8x256xf32>
    %c64_i32 = arith.constant 64 : i32
    %71 = tpu.dynamic_rotate %70 by %c64_i32 dim 1 : vector<8x256xf32>, i32 -> vector<8x256xf32>
    %72 = arith.maximumf %70, %71 : vector<8x256xf32>
    %c128_i32 = arith.constant 128 : i32
    %73 = tpu.dynamic_rotate %72 by %c128_i32 dim 1 : vector<8x256xf32>, i32 -> vector<8x256xf32>
    %74 = arith.maximumf %72, %73 : vector<8x256xf32>
    %75 = arith.subf %68, %74 : vector<8x256xf32>
    %76 = math.exp %75 : vector<8x256xf32>
    %c0_27 = arith.constant 0 : index
    %c0_28 = arith.constant 0 : index
    %77 = vector.load %arg5[%c0_27, %c0_28] : memref<8x256xf32, #tpu.memory_space<vmem>>, vector<8x256xf32>
    %78 = arith.mulf %76, %77 : vector<8x256xf32>
    %c32_i32_29 = arith.constant 32 : i32
    %79 = tpu.dynamic_rotate %78 by %c32_i32_29 dim 1 : vector<8x256xf32>, i32 -> vector<8x256xf32>
    %80 = arith.addf %78, %79 : vector<8x256xf32>
    %c32_i32_30 = arith.constant 32 : i32
    %81 = tpu.dynamic_rotate %76 by %c32_i32_30 dim 1 : vector<8x256xf32>, i32 -> vector<8x256xf32>
    %82 = arith.addf %76, %81 : vector<8x256xf32>
    %c64_i32_31 = arith.constant 64 : i32
    %83 = tpu.dynamic_rotate %80 by %c64_i32_31 dim 1 : vector<8x256xf32>, i32 -> vector<8x256xf32>
    %84 = arith.addf %80, %83 : vector<8x256xf32>
    %c64_i32_32 = arith.constant 64 : i32
    %85 = tpu.dynamic_rotate %82 by %c64_i32_32 dim 1 : vector<8x256xf32>, i32 -> vector<8x256xf32>
    %86 = arith.addf %82, %85 : vector<8x256xf32>
    %c128_i32_33 = arith.constant 128 : i32
    %87 = tpu.dynamic_rotate %84 by %c128_i32_33 dim 1 : vector<8x256xf32>, i32 -> vector<8x256xf32>
    %88 = arith.addf %84, %87 : vector<8x256xf32>
    %c128_i32_34 = arith.constant 128 : i32
    %89 = tpu.dynamic_rotate %86 by %c128_i32_34 dim 1 : vector<8x256xf32>, i32 -> vector<8x256xf32>
    %90 = arith.addf %86, %89 : vector<8x256xf32>
    %91 = vector.extract_strided_slice %88 {offsets = [0, 0], sizes = [8, 32], strides = [1, 1]} : vector<8x256xf32> to vector<8x32xf32>
    %92 = vector.extract_strided_slice %90 {offsets = [0, 0], sizes = [8, 32], strides = [1, 1]} : vector<8x256xf32> to vector<8x32xf32>
    %93 = arith.divf %91, %92 : vector<8x32xf32>
    %c0_35 = arith.constant 0 : index
    %c0_36 = arith.constant 0 : index
    %94 = vector.load %arg6[%c0_35, %c0_36] : memref<8x32xf32, #tpu.memory_space<vmem>>, vector<8x32xf32>
    tpu.vector_store %arg6[%c0_35, %c0_36], %93 {strides = array<i32>} : memref<8x32xf32, #tpu.memory_space<vmem>>, vector<8x32xf32>,
    return
  }
  func.func @transform_0(%arg0: i32) -> (i32, i32) {
    %c0_i32 = arith.constant 0 : i32
    %c0_i32_0 = arith.constant 0 : i32
    return %arg0, %c0_i32 : i32, i32
  }
  func.func @transform_1(%arg0: i32) -> (i32, i32) {
    %c0_i32 = arith.constant 0 : i32
    %c0_i32_0 = arith.constant 0 : i32
    return %arg0, %c0_i32 : i32, i32
  }
  func.func @transform_2(%arg0: i32) -> (i32, i32) {
    %c0_i32 = arith.constant 0 : i32
    %c0_i32_0 = arith.constant 0 : i32
    return %arg0, %c0_i32 : i32, i32
  }
  func.func @transform_3(%arg0: i32) -> (i32, i32) {
    %c0_i32 = arith.constant 0 : i32
    %c0_i32_0 = arith.constant 0 : i32
    return %arg0, %c0_i32 : i32, i32
  }
  func.func @transform_4(%arg0: i32) -> (i32, i32) {
    %c0_i32 = arith.constant 0 : i32
    %c0_i32_0 = arith.constant 0 : i32
    return %arg0, %c0_i32 : i32, i32
  }
  func.func @transform_5(%arg0: i32) -> (i32, i32) {
    %c0_i32 = arith.constant 0 : i32
    %c0_i32_0 = arith.constant 0 : i32
    return %arg0, %c0_i32 : i32, i32
  }
}

</mosaic_0001>

<llo_original>
// kernel: tpu_custom_call.1
$region0: #{tpu_custom_call.1}
  #allocation0 [shape = 'u32[]', space=smem, size = 0x4, offset = 0x4, fixed_abs, tag = 'smem constant byte address 0x4 - core index']
  #allocation1 [shape = 'u32[144,128]{1,0:T(1,128)}', space=vmem, size = 0x12000, scoped, tag = 'internal scratch']
  #allocation2 [shape = 'f32[8,256]{1,0:T(8,128)}', space=vmem, size = 0x2000, scoped, tag = 'scratch operand']
  %s0 = inlined_call_operand.hbm [shape: f32[24,32], index: 0, kind: input, shape index: {}]
  %s1 = inlined_call_operand.hbm [shape: f32[24,32], index: 1, kind: input, shape index: {}]
  %s2 = inlined_call_operand.hbm [shape: f32[24,256], index: 2, kind: input, shape index: {}]
  %s3 = inlined_call_operand.hbm [shape: f32[24,256], index: 3, kind: input, shape index: {}]
  %s4 = inlined_call_operand.hbm [shape: f32[24,256], index: 4, kind: input, shape index: {}]
  %s5 = inlined_call_operand.hbm [shape: f32[24,32], index: 5, kind: output, shape index: {}]
  %s6 = sld [smem:[#allocation0]]
  $region73: #{tpu_custom_call.1} parent=0
    _
  %s8 = ssub.s32 1, %s6
  %s9 = scalar_select 0, %s8, %s6
  $region1: #{tpu_custom_call.1} parent=0
    #allocation3 [shape = 'u8[8192]{0}', space=vmem, size = 0x2000, scoped, tag = 'input window, operand 0']
    #allocation4 [shape = 's32[2]{0}', space=sflag, size = 0x8, scoped, tag = 'scoped memory for tpu_custom_call.1']
    #allocation5 [shape = 's32[2]{0}', space=sflag, size = 0x8, scoped, tag = 'scoped memory for tpu_custom_call.1']
    #allocation6 [shape = 'u8[8192]{0}', space=vmem, size = 0x2000, scoped, tag = 'input window, operand 1']
    #allocation7 [shape = 's32[2]{0}', space=sflag, size = 0x8, scoped, tag = 'scoped memory for tpu_custom_call.1']
    #allocation8 [shape = 'u8[16384]{0}', space=vmem, size = 0x4000, scoped, tag = 'input window, operand 2']
    #allocation9 [shape = 'u8[16384]{0}', space=vmem, size = 0x4000, scoped, tag = 'input window, operand 3']
    #allocation10 [shape = 's32[2]{0}', space=sflag, size = 0x8, scoped, tag = 'scoped memory for tpu_custom_call.1']
    #allocation11 [shape = 'u8[16384]{0}', space=vmem, size = 0x4000, scoped, tag = 'input window, operand 4']
    #allocation12 [shape = 'u8[8192]{0}', space=vmem, size = 0x2000, scoped, tag = 'output window, operand 0']
    %10 = vsyncpa [#allocation4], 0
    %s11 = scalar_lea.sflag [#allocation4], 1
    %12 = vsyncpa %s11, 0
    %13 = vsyncpa [#allocation7], 0
    %s14 = scalar_lea.sflag [#allocation7], 1
    %15 = vsyncpa %s14, 0
    %16 = vsyncpa [#allocation10], 0
    %s17 = scalar_lea.sflag [#allocation10], 1
    %18 = vsyncpa %s17, 0
    %19 = vsyncpa [#allocation5], 0
    %s20 = scalar_lea.sflag [#allocation5], 1
    %21 = vsyncpa %s20, 0
    loop: start=0, step=1, limit=5
    $region2: #{tpu_custom_call.1} parent=1 // loop_pre_header
      _
    $region3: #{tpu_custom_call.1} parent=1 // loop_header
      %s23 = sphi 0, %s27
      %p24 = scmp.ge.s32.totalorder %s23, 5
      %s33 = sphi 0, %s35
      %s36 = sphi 0, %s33
      %s37 = sphi 0, %s36
      %s53 = sphi 0, %s37
      %s59 = sphi 0, %s61
      %s62 = sphi 0, %s59
      %s63 = sphi 0, %s62
      %s79 = sphi 0, %s63
      %s85 = sphi 0, %s87
      %s88 = sphi 0, %s85
      %s89 = sphi 0, %s88
      %s105 = sphi 0, %s89
      %s111 = sphi 0, %s113
      %s114 = sphi 0, %s111
      %s115 = sphi 0, %s114
      %s131 = sphi 0, %s115
      %s137 = sphi 0, %s139
      %s140 = sphi 0, %s137
      %s141 = sphi 0, %s140
      %s157 = sphi 0, %s141
      %s163 = sphi 0, %s165
      %s166 = sphi 0, %s163
      %s167 = sphi 0, %s166
      %s183 = sphi 0, %s167
    $region4: #{tpu_custom_call.1} parent=1 // loop_header_branch
      %26 = sbr.rel (%p24) target = $region8
    $region5: #{tpu_custom_call.1} parent=1 // loop_body
      %s28 = ssub.s32 %s23, 1
      %s29 = ssub.s32 %s23, 2
      %s30 = sadd.s32 %s23, 1
      %s31 = ssub.s32 %s23, %s30
      %p32 = scmp.eq.s32.totalorder %s31, 0
      %s34 = sadd.s32 %s33, 1
      %s35 = scalar_select %p32, %s33, %s34
      %p38 = pneg %p32
      %p39 = scmp.eq.s32.totalorder %s23, 2
      %p40 = por %p38, %p39
      %p41 = scmp.ne.s32.totalorder %s33, %s36
      %p42 = scmp.eq.s32.totalorder %s23, 0
      %p43 = por %p41, %p42
      %p44 = scmp.ne.s32.totalorder %s33, %s36
      %p45 = scmp.eq.s32.totalorder %s28, 2
      %p46 = por %p44, %p45
      %p47 = scmp.ne.s32.totalorder %s36, %s37
      %p48 = scmp.eq.s32.totalorder %s28, 0
      %p49 = por %p47, %p48
      %p50 = scmp.ne.s32.totalorder %s36, %s37
      %p51 = scmp.eq.s32.totalorder %s29, 2
      %p52 = por %p50, %p51
      %p54 = scmp.ne.s32.totalorder %s37, %s53
      %p55 = scmp.eq.s32.totalorder %s29, 0
      %p56 = por %p54, %p55
      %s57 = ssub.s32 %s23, %s30
      %p58 = scmp.eq.s32.totalorder %s57, 0
      %s60 = sadd.s32 %s59, 1
      %s61 = scalar_select %p58, %s59, %s60
      %p64 = pneg %p58
      %p65 = scmp.eq.s32.totalorder %s23, 2
      %p66 = por %p64, %p65
      %p67 = scmp.ne.s32.totalorder %s59, %s62
      %p68 = scmp.eq.s32.totalorder %s23, 0
      %p69 = por %p67, %p68
      %p70 = scmp.ne.s32.totalorder %s59, %s62
      %p71 = scmp.eq.s32.totalorder %s28, 2
      %p72 = por %p70, %p71
      %p73 = scmp.ne.s32.totalorder %s62, %s63
      %p74 = scmp.eq.s32.totalorder %s28, 0
      %p75 = por %p73, %p74
      %p76 = scmp.ne.s32.totalorder %s62, %s63
      %p77 = scmp.eq.s32.totalorder %s29, 2
      %p78 = por %p76, %p77
      %p80 = scmp.ne.s32.totalorder %s63, %s79
      %p81 = scmp.eq.s32.totalorder %s29, 0
      %p82 = por %p80, %p81
      %s83 = ssub.s32 %s23, %s30
      %p84 = scmp.eq.s32.totalorder %s83, 0
      %s86 = sadd.s32 %s85, 1
      %s87 = scalar_select %p84, %s85, %s86
      %p90 = pneg %p84
      %p91 = scmp.eq.s32.totalorder %s23, 2
      %p92 = por %p90, %p91
      %p93 = scmp.ne.s32.totalorder %s85, %s88
      %p94 = scmp.eq.s32.totalorder %s23, 0
      %p95 = por %p93, %p94
      %p96 = scmp.ne.s32.totalorder %s85, %s88
      %p97 = scmp.eq.s32.totalorder %s28, 2
      %p98 = por %p96, %p97
      %p99 = scmp.ne.s32.totalorder %s88, %s89
      %p100 = scmp.eq.s32.totalorder %s28, 0
      %p101 = por %p99, %p100
      %p102 = scmp.ne.s32.totalorder %s88, %s89
      %p103 = scmp.eq.s32.totalorder %s29, 2
      %p104 = por %p102, %p103
      %p106 = scmp.ne.s32.totalorder %s89, %s105
      %p107 = scmp.eq.s32.totalorder %s29, 0
      %p108 = por %p106, %p107
      %s109 = ssub.s32 %s23, %s30
      %p110 = scmp.eq.s32.totalorder %s109, 0
      %s112 = sadd.s32 %s111, 1
      %s113 = scalar_select %p110, %s111, %s112
      %p116 = pneg %p110
      %p117 = scmp.eq.s32.totalorder %s23, 2
      %p118 = por %p116, %p117
      %p119 = scmp.ne.s32.totalorder %s111, %s114
      %p120 = scmp.eq.s32.totalorder %s23, 0
      %p121 = por %p119, %p120
      %p122 = scmp.ne.s32.totalorder %s111, %s114
      %p123 = scmp.eq.s32.totalorder %s28, 2
      %p124 = por %p122, %p123
      %p125 = scmp.ne.s32.totalorder %s114, %s115
      %p126 = scmp.eq.s32.totalorder %s28, 0
      %p127 = por %p125, %p126
      %p128 = scmp.ne.s32.totalorder %s114, %s115
      %p129 = scmp.eq.s32.totalorder %s29, 2
      %p130 = por %p128, %p129
      %p132 = scmp.ne.s32.totalorder %s115, %s131
      %p133 = scmp.eq.s32.totalorder %s29, 0
      %p134 = por %p132, %p133
      %s135 = ssub.s32 %s23, %s30
      %p136 = scmp.eq.s32.totalorder %s135, 0
      %s138 = sadd.s32 %s137, 1
      %s139 = scalar_select %p136, %s137, %s138
      %p142 = pneg %p136
      %p143 = scmp.eq.s32.totalorder %s23, 2
      %p144 = por %p142, %p143
      %p145 = scmp.ne.s32.totalorder %s137, %s140
      %p146 = scmp.eq.s32.totalorder %s23, 0
      %p147 = por %p145, %p146
      %p148 = scmp.ne.s32.totalorder %s137, %s140
      %p149 = scmp.eq.s32.totalorder %s28, 2
      %p150 = por %p148, %p149
      %p151 = scmp.ne.s32.totalorder %s140, %s141
      %p152 = scmp.eq.s32.totalorder %s28, 0
      %p153 = por %p151, %p152
      %p154 = scmp.ne.s32.totalorder %s140, %s141
      %p155 = scmp.eq.s32.totalorder %s29, 2
      %p156 = por %p154, %p155
      %p158 = scmp.ne.s32.totalorder %s141, %s157
      %p159 = scmp.eq.s32.totalorder %s29, 0
      %p160 = por %p158, %p159
      %s161 = ssub.s32 %s23, %s30
      %p162 = scmp.eq.s32.totalorder %s161, 0
      %s164 = sadd.s32 %s163, 1
      %s165 = scalar_select %p162, %s163, %s164
      %p168 = pneg %p162
      %p169 = scmp.eq.s32.totalorder %s23, 2
      %p170 = por %p168, %p169
      %p171 = scmp.ne.s32.totalorder %s163, %s166
      %p172 = scmp.eq.s32.totalorder %s23, 0
      %p173 = por %p171, %p172
      %p174 = scmp.ne.s32.totalorder %s163, %s166
      %p175 = scmp.eq.s32.totalorder %s28, 2
      %p176 = por %p174, %p175
      %p177 = scmp.ne.s32.totalorder %s166, %s167
      %p178 = scmp.eq.s32.totalorder %s28, 0
      %p179 = por %p177, %p178
      %p180 = scmp.ne.s32.totalorder %s166, %s167
      %p181 = scmp.eq.s32.totalorder %s29, 2
      %p182 = por %p180, %p181
      %p184 = scmp.ne.s32.totalorder %s167, %s183
      %p185 = scmp.eq.s32.totalorder %s29, 0
      %p186 = por %p184, %p185
      %p187 = scmp.le.s32.totalorder 1, %s23
      %p188 = scmp.lt.s32.totalorder %s23, 4
      %p189 = pnand %p187, %p188
      %p190 = pneg %p189
      // Predicated region
      $region9: #{tpu_custom_call.1} parent=5 // pred_check
        _
      $region10: #{tpu_custom_call.1} parent=5 // pred_check_branch
        %192 = sbr.rel (%p189) target = $region12
      $region11: #{tpu_custom_call.1} parent=5 // pred_region
        %s193 = ssub.s32 %s23, 1
      $region12: #{tpu_custom_call.1} parent=5 // pred_fallthru
        _
      %p194 = scmp.lt.s32.totalorder %s23, 3
      // Predicated region
      $region13: #{tpu_custom_call.1} parent=5 // pred_check
        %p195 = pneg %p194
      $region14: #{tpu_custom_call.1} parent=5 // pred_check_branch
        %197 = sbr.rel (%p195) target = $region16
      $region15: #{tpu_custom_call.1} parent=5 // pred_region
        // Predicated region
        $region17: #{tpu_custom_call.1} parent=15 // pred_check
          %p198 = pneg %p43
        $region18: #{tpu_custom_call.1} parent=15 // pred_check_branch
          %200 = sbr.rel (%p198) target = $region20
        $region19: #{tpu_custom_call.1} parent=15 // pred_region
          %s201 = sand.u32 %s33, 1
          %s202 = scalar_lea.sflag [#allocation4], %s201
          %s203 = sand.u32 %s33, 1
          %s204 = smul.addr %s203, 8
          %s205 = scalar_lea.vmem [#allocation3], %s204
          %s207 = ssub.s32 128, 128
          %208 = vsyncadd %s202, %s207
          %s209 = smul.addr %s23, 128
          %s210 = scalar_lea.hbm %s0, %s209
          %s212 = sshll.u32 %s205, 4
          %s213 = int_to_ptr.vmem [resolvable:$true] %s212
          %215 = dma.hbm_to_vmem [thread:$0]  %s210, 128, %s213, %s202
        $region20: #{tpu_custom_call.1} parent=15 // pred_fallthru
          _
        // Predicated region
        $region21: #{tpu_custom_call.1} parent=15 // pred_check
          %p216 = pneg %p69
        $region22: #{tpu_custom_call.1} parent=15 // pred_check_branch
          %218 = sbr.rel (%p216) target = $region24
        $region23: #{tpu_custom_call.1} parent=15 // pred_region
          %s219 = sand.u32 %s23, 1
          %s220 = scalar_lea.sflag [#allocation7], %s219
          %s221 = sand.u32 %s59, 1
          %s222 = smul.addr %s221, 8
          %s223 = scalar_lea.vmem [#allocation6], %s222
          %s225 = ssub.s32 128, 128
          %226 = vsyncadd %s220, %s225
          %s227 = smul.addr %s23, 128
          %s228 = scalar_lea.hbm %s1, %s227
          %s230 = sshll.u32 %s223, 4
          %s231 = int_to_ptr.vmem [resolvable:$true] %s230
          %233 = dma.hbm_to_vmem [thread:$0]  %s228, 128, %s231, %s220
        $region24: #{tpu_custom_call.1} parent=15 // pred_fallthru
          _
        // Predicated region
        $region25: #{tpu_custom_call.1} parent=15 // pred_check
          %p234 = pneg %p95
        $region26: #{tpu_custom_call.1} parent=15 // pred_check_branch
          %236 = sbr.rel (%p234) target = $region28
        $region27: #{tpu_custom_call.1} parent=15 // pred_region
          %s237 = sand.u32 %s23, 1
          %s238 = scalar_lea.sflag [#allocation7], %s237
          %s239 = sand.u32 %s85, 1
          %s240 = smul.addr %s239, 16
          %s241 = scalar_lea.vmem [#allocation8], %s240
          %s243 = ssub.s32 256, 256
          %244 = vsyncadd %s238, %s243
          %s245 = smul.addr %s23, 2
          %s246 = smul.addr %s245, 128
          %s247 = scalar_lea.hbm %s2, %s246
          %s249 = sshll.u32 %s241, 4
          %s250 = int_to_ptr.vmem [resolvable:$true] %s249
          %252 = dma.hbm_to_vmem [thread:$0]  %s247, 256, %s250, %s238
        $region28: #{tpu_custom_call.1} parent=15 // pred_fallthru
          _
        // Predicated region
        $region29: #{tpu_custom_call.1} parent=15 // pred_check
          %p253 = pneg %p121
        $region30: #{tpu_custom_call.1} parent=15 // pred_check_branch
          %255 = sbr.rel (%p253) target = $region32
        $region31: #{tpu_custom_call.1} parent=15 // pred_region
          %s256 = sand.u32 %s23, 1
          %s257 = scalar_lea.sflag [#allocation10], %s256
          %s258 = sand.u32 %s111, 1
          %s259 = smul.addr %s258, 16
          %s260 = scalar_lea.vmem [#allocation9], %s259
          %s262 = ssub.s32 256, 256
          %263 = vsyncadd %s257, %s262
          %s264 = smul.addr %s23, 2
          %s265 = smul.addr %s264, 128
          %s266 = scalar_lea.hbm %s3, %s265
          %s268 = sshll.u32 %s260, 4
          %s269 = int_to_ptr.vmem [resolvable:$true] %s268
          %271 = dma.hbm_to_vmem [thread:$0]  %s266, 256, %s269, %s257
        $region32: #{tpu_custom_call.1} parent=15 // pred_fallthru
          _
        // Predicated region
        $region33: #{tpu_custom_call.1} parent=15 // pred_check
          %p272 = pneg %p147
        $region34: #{tpu_custom_call.1} parent=15 // pred_check_branch
          %274 = sbr.rel (%p272) target = $region36
        $region35: #{tpu_custom_call.1} parent=15 // pred_region
          %s275 = sand.u32 %s23, 1
          %s276 = scalar_lea.sflag [#allocation10], %s275
          %s277 = sand.u32 %s137, 1
          %s278 = smul.addr %s277, 16
          %s279 = scalar_lea.vmem [#allocation11], %s278
          %s281 = ssub.s32 256, 256
          %282 = vsyncadd %s276, %s281
          %s283 = smul.addr %s23, 2
          %s284 = smul.addr %s283, 128
          %s285 = scalar_lea.hbm %s4, %s284
          %s287 = sshll.u32 %s279, 4
          %s288 = int_to_ptr.vmem [resolvable:$true] %s287
          %290 = dma.hbm_to_vmem [thread:$0]  %s285, 256, %s288, %s276
        $region36: #{tpu_custom_call.1} parent=15 // pred_fallthru
          _
      $region16: #{tpu_custom_call.1} parent=5 // pred_fallthru
        _
      %p291 = scmp.le.s32.totalorder 1, %s23
      %p292 = scmp.lt.s32.totalorder %s23, 4
      %p293 = pnand %p291, %p292
      %p294 = pneg %p293
      // Predicated region
      $region37: #{tpu_custom_call.1} parent=5 // pred_check
        _
      $region38: #{tpu_custom_call.1} parent=5 // pred_check_branch
        %296 = sbr.rel (%p293) target = $region40
      $region39: #{tpu_custom_call.1} parent=5 // pred_region
        %s297 = ssub.s32 %s23, 1
        %s298 = sand.u32 %s36, 1
        %s299 = scalar_lea.sflag [#allocation4], %s298
        %s300 = sand.u32 %s36, 1
        %s301 = smul.addr %s300, 8
        %s302 = scalar_lea.vmem [#allocation3], %s301
        // Predicated region
        $region41: #{tpu_custom_call.1} parent=39 // pred_check
          %p303 = pneg %p49
        $region42: #{tpu_custom_call.1} parent=39 // pred_check_branch
          %305 = sbr.rel (%p303) target = $region44
        $region43: #{tpu_custom_call.1} parent=39 // pred_region
          %306 = dma.done %s299, 128
        $region44: #{tpu_custom_call.1} parent=39 // pred_fallthru
          _
        %s307 = sand.u32 %s28, 1
        %s308 = scalar_lea.sflag [#allocation7], %s307
        %s309 = sand.u32 %s62, 1
        %s310 = smul.addr %s309, 8
        %s311 = scalar_lea.vmem [#allocation6], %s310
        // Predicated region
        $region45: #{tpu_custom_call.1} parent=39 // pred_check
          %p312 = pneg %p75
        $region46: #{tpu_custom_call.1} parent=39 // pred_check_branch
          %314 = sbr.rel (%p312) target = $region48
        $region47: #{tpu_custom_call.1} parent=39 // pred_region
          %315 = dma.done %s308, 128
        $region48: #{tpu_custom_call.1} parent=39 // pred_fallthru
          _
        %s316 = sand.u32 %s28, 1
        %s317 = scalar_lea.sflag [#allocation7], %s316
        %s318 = sand.u32 %s88, 1
        %s319 = smul.addr %s318, 16
        %s320 = scalar_lea.vmem [#allocation8], %s319
        // Predicated region
        $region49: #{tpu_custom_call.1} parent=39 // pred_check
          %p321 = pneg %p101
        $region50: #{tpu_custom_call.1} parent=39 // pred_check_branch
          %323 = sbr.rel (%p321) target = $region52
        $region51: #{tpu_custom_call.1} parent=39 // pred_region
          %324 = dma.done %s317, 256
        $region52: #{tpu_custom_call.1} parent=39 // pred_fallthru
          _
        %s325 = sand.u32 %s28, 1
        %s326 = scalar_lea.sflag [#allocation10], %s325
        %s327 = sand.u32 %s114, 1
        %s328 = smul.addr %s327, 16
        %s329 = scalar_lea.vmem [#allocation9], %s328
        // Predicated region
        $region53: #{tpu_custom_call.1} parent=39 // pred_check
          %p330 = pneg %p127
        $region54: #{tpu_custom_call.1} parent=39 // pred_check_branch
          %332 = sbr.rel (%p330) target = $region56
        $region55: #{tpu_custom_call.1} parent=39 // pred_region
          %333 = dma.done %s326, 256
        $region56: #{tpu_custom_call.1} parent=39 // pred_fallthru
          _
        %s334 = sand.u32 %s28, 1
        %s335 = scalar_lea.sflag [#allocation10], %s334
        %s336 = sand.u32 %s140, 1
        %s337 = smul.addr %s336, 16
        %s338 = scalar_lea.vmem [#allocation11], %s337
        // Predicated region
        $region57: #{tpu_custom_call.1} parent=39 // pred_check
          %p339 = pneg %p153
        $region58: #{tpu_custom_call.1} parent=39 // pred_check_branch
          %341 = sbr.rel (%p339) target = $region60
        $region59: #{tpu_custom_call.1} parent=39 // pred_region
          %342 = dma.done %s335, 256
        $region60: #{tpu_custom_call.1} parent=39 // pred_fallthru
          _
        %s343 = sand.u32 %s36, 1
        %s344 = scalar_lea.sflag [#allocation4], %s343
        %s345 = sand.u32 %s36, 1
        %s346 = smul.addr %s345, 8
        %s347 = scalar_lea.vmem [#allocation3], %s346
        %p348 = pneg %p49
        %p349 = pneg %p46
        %s350 = sand.u32 %s28, 1
        %s351 = scalar_lea.sflag [#allocation7], %s350
        %s352 = sand.u32 %s62, 1
        %s353 = smul.addr %s352, 8
        %s354 = scalar_lea.vmem [#allocation6], %s353
        %p355 = pneg %p75
        %p356 = pneg %p72
        %s357 = sand.u32 %s28, 1
        %s358 = scalar_lea.sflag [#allocation7], %s357
        %s359 = sand.u32 %s88, 1
        %s360 = smul.addr %s359, 16
        %s361 = scalar_lea.vmem [#allocation8], %s360
        %p362 = pneg %p101
        %p363 = pneg %p98
        %s364 = sand.u32 %s28, 1
        %s365 = scalar_lea.sflag [#allocation10], %s364
        %s366 = sand.u32 %s114, 1
        %s367 = smul.addr %s366, 16
        %s368 = scalar_lea.vmem [#allocation9], %s367
        %p369 = pneg %p127
        %p370 = pneg %p124
        %s371 = sand.u32 %s28, 1
        %s372 = scalar_lea.sflag [#allocation10], %s371
        %s373 = sand.u32 %s140, 1
        %s374 = smul.addr %s373, 16
        %s375 = scalar_lea.vmem [#allocation11], %s374
        %p376 = pneg %p153
        %p377 = pneg %p150
        %p378 = pneg %p179
        %p379 = pneg %p176
        %s380 = sand.u32 %s166, 1
        %s381 = scalar_lea.sflag [#allocation5], %s380
        %s382 = sand.u32 %s166, 1
        %s383 = smul.addr %s382, 8
        %s384 = scalar_lea.vmem [#allocation12], %s383
        %v385 = vld [vmem:[%s302] sm:$0xff]
        %v386 = vld [vmem:[%s311] sm:$0xff]
        %v387 = vld [vmem:[%s320] sm:$0xff]
        %v388 = vld [vmem:[%s320 + $0x8] sm:$0xff]
        %v389 = vld [vmem:[%s329] sm:$0xff]
        %v390 = vld [vmem:[%s329 + $0x8] sm:$0xff]
        %v391 = vadd.f32 %v385, %v386
        %vm392 = vcmask 261120
        %v393 = vsel %vm392, %v391, 0.0
        %394 = vadd.xlane.f32.xlu0 %v393
        %v395 = vpop.xlane.xlu0 %394
        %v396 = vadd.f32 %v387, %v389
        %v397 = vadd.f32 %v388, %v390
        %v398 = vsel %vm392, %v396, 0.0
        %399 = vadd.xlane.f32.xlu0 %v398
        %v400 = vpop.xlane.xlu0 %399
        %v401 = vadd.f32 %v395, %v400
        %v402 = vadd.f32 %v386, %v401
        %403 = vst.msk [vmem:[#allocation2] sm:$0xff] %vm392, %v402
        %405 = vrot.lane.b32.xlu0 %v396, 96
        %v406 = vpop.permute.xlu0 %405
        %v408 = vsel %vm392, %v406, 0.0
        %409 = vadd.xlane.f32.xlu0 %v408
        %v410 = vpop.xlane.xlu0 %409
        %v411 = vadd.f32 %v395, %v410
        %v412 = vadd.f32 %v386, %v411
        %414 = vrot.lane.b32.xlu0 %v412, 32
        %v415 = vpop.permute.xlu0 %414
        %vm417 = vcmask 523520
        %418 = vst.msk [vmem:[#allocation2] sm:$0xff] %vm417, %v415
        %419 = vrot.lane.b32.xlu0 %v396, 64
        %v420 = vpop.permute.xlu0 %419
        %v422 = vsel %vm392, %v420, 0.0
        %423 = vadd.xlane.f32.xlu0 %v422
        %v424 = vpop.xlane.xlu0 %423
        %v425 = vadd.f32 %v395, %v424
        %v426 = vadd.f32 %v386, %v425
        %428 = vrot.lane.b32.xlu0 %v426, 64
        %v429 = vpop.permute.xlu0 %428
        %vm431 = vcmask 785920
        %432 = vst.msk [vmem:[#allocation2] sm:$0xff] %vm431, %v429
        %433 = vrot.lane.b32.xlu0 %v396, 32
        %v434 = vpop.permute.xlu0 %433
        %v436 = vsel %vm392, %v434, 0.0
        %437 = vadd.xlane.f32.xlu0 %v436
        %v438 = vpop.xlane.xlu0 %437
        %v439 = vadd.f32 %v395, %v438
        %v440 = vadd.f32 %v386, %v439
        %442 = vrot.lane.b32.xlu0 %v440, 96
        %v443 = vpop.permute.xlu0 %442
        %vm445 = vcmask 1048320
        %446 = vst.msk [vmem:[#allocation2] sm:$0xff] %vm445, %v443
        %v447 = vsel %vm392, %v397, 0.0
        %448 = vadd.xlane.f32.xlu0 %v447
        %v449 = vpop.xlane.xlu0 %448
        %v450 = vadd.f32 %v395, %v449
        %v451 = vadd.f32 %v386, %v450
        %452 = vst.msk [vmem:[#allocation2 + $0x8] sm:$0xff] %vm392, %v451
        %454 = vrot.lane.b32.xlu0 %v397, 96
        %v455 = vpop.permute.xlu0 %454
        %v457 = vsel %vm392, %v455, 0.0
        %458 = vadd.xlane.f32.xlu0 %v457
        %v459 = vpop.xlane.xlu0 %458
        %v460 = vadd.f32 %v395, %v459
        %v461 = vadd.f32 %v386, %v460
        %463 = vrot.lane.b32.xlu0 %v461, 32
        %v464 = vpop.permute.xlu0 %463
        %466 = vst.msk [vmem:[#allocation2 + $0x8] sm:$0xff] %vm417, %v464
        %467 = vrot.lane.b32.xlu0 %v397, 64
        %v468 = vpop.permute.xlu0 %467
        %v470 = vsel %vm392, %v468, 0.0
        %471 = vadd.xlane.f32.xlu0 %v470
        %v472 = vpop.xlane.xlu0 %471
        %v473 = vadd.f32 %v395, %v472
        %v474 = vadd.f32 %v386, %v473
        %476 = vrot.lane.b32.xlu0 %v474, 64
        %v477 = vpop.permute.xlu0 %476
        %479 = vst.msk [vmem:[#allocation2 + $0x8] sm:$0xff] %vm431, %v477
        %480 = vrot.lane.b32.xlu0 %v397, 32
        %v481 = vpop.permute.xlu0 %480
        %v483 = vsel %vm392, %v481, 0.0
        %484 = vadd.xlane.f32.xlu0 %v483
        %v485 = vpop.xlane.xlu0 %484
        %v486 = vadd.f32 %v395, %v485
        %v487 = vadd.f32 %v386, %v486
        %489 = vrot.lane.b32.xlu0 %v487, 96
        %v490 = vpop.permute.xlu0 %489
        %492 = vst.msk [vmem:[#allocation2 + $0x8] sm:$0xff] %vm445, %v490
        %v493 = vld [vmem:[#allocation2] sm:$0xff]
        %v494 = vld [vmem:[#allocation2 + $0x8] sm:$0xff]
        %v495 = vadd.f32 %v493, %v387
        %v496 = vadd.f32 %v494, %v388
        %v497 = vmul.f32 %v495, 0.01
        %v498 = vmul.f32 %v496, 0.01
        %v499 = vmax.f32 %v495, %v497
        %v500 = vmax.f32 %v496, %v498
        %501 = vrot.lane.b32.xlu0 %v499, 32
        %v502 = vpop.permute.xlu0 %501
        %503 = vrot.lane.b32.xlu0 %v500, 32
        %v504 = vpop.permute.xlu0 %503
        %v505 = vlaneseq
        %v506 = vand.u32 %v505, 127
        %vm507 = vcmp.lt.s32.totalorder %v506, 32
        %v508 = vsel %vm507, %v502, %v504
        %v509 = vsel %vm507, %v504, %v502
        %v510 = vmax.f32 %v499, %v509
        %v511 = vmax.f32 %v500, %v508
        %512 = vrot.lane.b32.xlu0 %v510, 64
        %v513 = vpop.permute.xlu0 %512
        %514 = vrot.lane.b32.xlu0 %v511, 64
        %v515 = vpop.permute.xlu0 %514
        %vm516 = vcmp.lt.s32.totalorder %v506, 64
        %v517 = vsel %vm516, %v513, %v515
        %v518 = vsel %vm516, %v515, %v513
        %v519 = vmax.f32 %v510, %v518
        %v520 = vmax.f32 %v511, %v517
        %v521 = vmax.f32 %v519, %v520
        %v522 = vsub.f32 %v499, %v521
        %v523 = vsub.f32 %v500, %v521
        %v524 = vmul.f32 %v522, 1.442695
        %v525 = vpow.pop %v524
        %v526 = vmul.f32 %v523, 1.442695
        %v527 = vpow.pop %v526
        %v528 = vld [vmem:[%s338] sm:$0xff]
        %v529 = vld [vmem:[%s338 + $0x8] sm:$0xff]
        %v530 = vmul.f32 %v525, %v528
        %v531 = vmul.f32 %v527, %v529
        %532 = vrot.lane.b32.xlu0 %v530, 32
        %v533 = vpop.permute.xlu0 %532
        %534 = vrot.lane.b32.xlu0 %v531, 32
        %v535 = vpop.permute.xlu0 %534
        %v536 = vsel %vm507, %v533, %v535
        %v537 = vsel %vm507, %v535, %v533
        %v538 = vadd.f32 %v530, %v537
        %v539 = vadd.f32 %v531, %v536
        %540 = vrot.lane.b32.xlu0 %v525, 32
        %v541 = vpop.permute.xlu0 %540
        %542 = vrot.lane.b32.xlu0 %v527, 32
        %v543 = vpop.permute.xlu0 %542
        %v544 = vsel %vm507, %v541, %v543
        %v545 = vsel %vm507, %v543, %v541
        %v546 = vadd.f32 %v525, %v545
        %v547 = vadd.f32 %v527, %v544
        %548 = vrot.lane.b32.xlu0 %v538, 64
        %v549 = vpop.permute.xlu0 %548
        %550 = vrot.lane.b32.xlu0 %v539, 64
        %v551 = vpop.permute.xlu0 %550
        %v552 = vsel %vm516, %v549, %v551
        %v553 = vsel %vm516, %v551, %v549
        %v554 = vadd.f32 %v538, %v553
        %v555 = vadd.f32 %v539, %v552
        %556 = vrot.lane.b32.xlu0 %v546, 64
        %v557 = vpop.permute.xlu0 %556
        %558 = vrot.lane.b32.xlu0 %v547, 64
        %v559 = vpop.permute.xlu0 %558
        %v560 = vsel %vm516, %v557, %v559
        %v561 = vsel %vm516, %v559, %v557
        %v562 = vadd.f32 %v546, %v561
        %v563 = vadd.f32 %v547, %v560
        %v564 = vadd.f32 %v554, %v555
        %v565 = vadd.f32 %v562, %v563
        %v566 = vrcp.pop %v565
        %v567 = vmul.f32 %v564, %v566
        %568 = vst.msk [vmem:[%s384] sm:$0xff] %vm392, %v567
        %s569 = sand.u32 %s166, 1
        %s570 = scalar_lea.sflag [#allocation5], %s569
        %s571 = sand.u32 %s166, 1
        %s572 = smul.addr %s571, 8
        %s573 = scalar_lea.vmem [#allocation12], %s572
        // Predicated region
        $region61: #{tpu_custom_call.1} parent=39 // pred_check
          %p574 = pneg %p176
        $region62: #{tpu_custom_call.1} parent=39 // pred_check_branch
          %576 = sbr.rel (%p574) target = $region64
        $region63: #{tpu_custom_call.1} parent=39 // pred_region
          %s578 = ssub.s32 128, 128
          %579 = vsyncadd %s570, %s578
          %s580 = smul.addr %s28, 128
          %s581 = scalar_lea.hbm %s5, %s580
          %s583 = sshll.u32 %s573, 4
          %s584 = int_to_ptr.vmem [resolvable:$true] %s583
          %586 = dma.vmem_to_hbm [thread:$0]  %s584, 128, %s581, %s570
        $region64: #{tpu_custom_call.1} parent=39 // pred_fallthru
          _
      $region40: #{tpu_custom_call.1} parent=5 // pred_fallthru
        _
      %p587 = scmp.le.s32.totalorder 2, %s23
      // Predicated region
      $region65: #{tpu_custom_call.1} parent=5 // pred_check
        %p588 = pneg %p587
      $region66: #{tpu_custom_call.1} parent=5 // pred_check_branch
        %590 = sbr.rel (%p588) target = $region68
      $region67: #{tpu_custom_call.1} parent=5 // pred_region
        %s591 = ssub.s32 %s23, 2
        // Predicated region
        $region69: #{tpu_custom_call.1} parent=67 // pred_check
          %p592 = pneg %p182
        $region70: #{tpu_custom_call.1} parent=67 // pred_check_branch
          %594 = sbr.rel (%p592) target = $region72
        $region71: #{tpu_custom_call.1} parent=67 // pred_region
          %s595 = sand.u32 %s167, 1
          %s596 = scalar_lea.sflag [#allocation5], %s595
          %s597 = sand.u32 %s167, 1
          %s598 = smul.addr %s597, 8
          %s599 = scalar_lea.vmem [#allocation12], %s598
          %600 = dma.done %s596, 128
        $region72: #{tpu_custom_call.1} parent=67 // pred_fallthru
          _
      $region68: #{tpu_custom_call.1} parent=5 // pred_fallthru
        _
    $region6: #{tpu_custom_call.1} parent=1 // loop_footer
      %s27 = sadd.s32 1, %s23
    $region7: #{tpu_custom_call.1} parent=1 // loop_footer_branch
      %22 = sbr.rel target = $region3
    $region8: #{tpu_custom_call.1} parent=1 // loop_exit
      _
    %601 = vsyncpa [#allocation4], 1
    %s602 = scalar_lea.sflag [#allocation4], 1
    %603 = vsyncpa %s602, 1
    %604 = vsyncpa [#allocation7], 1
    %s605 = scalar_lea.sflag [#allocation7], 1
    %606 = vsyncpa %s605, 1
    %607 = vsyncpa [#allocation10], 1
    %s608 = scalar_lea.sflag [#allocation10], 1
    %609 = vsyncpa %s608, 1
    %610 = vsyncpa [#allocation5], 1
    %s611 = scalar_lea.sflag [#allocation5], 1
    %612 = vsyncpa %s611, 1

</llo_original>
